<compile_context>
chip_gen: v7x
topology: tpu7x:2x2x1
jax: 0.10.0
libtpu: 0.0.40
codegen_flags: <defaults>
</compile_context>

<pallas_src>
import jax
import jax.numpy as jnp
from jax import lax
from jax.experimental import pallas as pl
from jax.experimental.pallas import tpu as pltpu


def _pick_chunk(total, preferred, multiple=1):
    """Largest chunk c <= preferred with total % c == 0 and (c % multiple == 0 or
    c == total). Falls back to the full extent (single block)."""
    preferred = max(1, min(preferred, total))
    for c in range(preferred, 0, -1):
        if total % c == 0 and (c % multiple == 0 or c == total):
            return c
    return total


# -----------------------------------------------------------------------------
# Kernel 1: input projection for all timesteps (hoisted out of the recurrence),
#           written out in time-major (T, N, 4H) layout.
# -----------------------------------------------------------------------------
def _proj_kernel(x_ref, wih_ref, b_ref, gx_ref):
    # x_ref : (tn, T, I)   row-major input slab (no XLA transpose of x needed)
    # wih   : (I, 4H)      input weights (possibly bf16 for the MXU)
    # b     : (1, 4H)      combined bias b_ih + b_hh (f32)
    # gx    : (T, tn, 4H)  time-major gate pre-activations (f32)
    tn, T, I = x_ref.shape
    G = wih_ref.shape[1]
    xb = x_ref[...].astype(wih_ref.dtype).reshape(tn * T, I)
    g = jnp.dot(xb, wih_ref[...], preferred_element_type=jnp.float32) + b_ref[...]
    g3 = g.reshape(tn, T, G)
    # Scatter time-slices into time-major layout (static unroll; pure VMEM
    # copies, overlapped with the pipeline's DMAs).
    for t in range(T):
        gx_ref[t] = g3[:, t, :]


def input_projection(x_nti, w_ih_t, bias, *, n_block_rows=8):
    """x_nti: (N, T, I); w_ih_t: (I, 4H); bias: (1, 4H) -> gx: (T, N, 4H) f32."""
    N, T, I = x_nti.shape
    G = w_ih_t.shape[1]
    # n_block_rows=8 keeps >=2 grid steps at demo size; raise to 128-256 at
    # production N for better MXU utilization.
    tn = _pick_chunk(N, n_block_rows, multiple=8)
    return pl.pallas_call(
        _proj_kernel,
        out_shape=jax.ShapeDtypeStruct((T, N, G), jnp.float32),
        grid=(N // tn,),
        in_specs=[
            pl.BlockSpec((tn, T, I), lambda n: (n, 0, 0)),
            pl.BlockSpec((I, G), lambda n: (0, 0)),
            pl.BlockSpec((1, G), lambda n: (0, 0)),
        ],
        out_specs=pl.BlockSpec((T, tn, G), lambda n: (0, n, 0)),
        compiler_params=pltpu.CompilerParams(dimension_semantics=("parallel",)),
    )(x_nti, w_ih_t, bias)


# -----------------------------------------------------------------------------
# Kernel 2: LSTM recurrence over streamed time-chunks + fused FC head epilogue.
# -----------------------------------------------------------------------------
def _lstm_fc_kernel(gx_ref, whh_ref, wfc_rows_ref, sel_ref, act_ref, wfca_ref,
                    bfc_ref, out_ref, h_scr, c_scr):
    # gx      : (Tc, N, 4H) precomputed x-projection (+ bias) for this time chunk
    # whh     : (H, 4H)     recurrent weights (possibly bf16)
    # wfc_rows: (N, H)      FC hidden weights replicated per row (row n uses gate
    #                       block a = n mod A of the PyTorch fc weight)
    # sel     : (B, N)      one-hot row->batch selector (groups of A rows)
    # act     : (B, A), wfca: (1, A), bfc: (1, 1)
    H = whh_ref.shape[0]
    Tc = gx_ref.shape[0]
    tc = pl.program_id(0)

    @pl.when(tc == 0)
    def _():
        h_scr[...] = jnp.zeros_like(h_scr)
        c_scr[...] = jnp.zeros_like(c_scr)

    mxu_dtype = whh_ref.dtype

    def step(s, carry):
        # The hidden-state projection is the only matmul left on the serial path.
        gates = gx_ref[s] + jnp.dot(
            h_scr[...].astype(mxu_dtype), whh_ref[...],
            preferred_element_type=jnp.float32)          # (N, 4H), f32
        # Gate order i, f, g, o (PyTorch convention).  With H a multiple of 128
        # each slice is a lane-aligned block.
        i = jax.nn.sigmoid(gates[:, 0 * H:1 * H])
        f = jax.nn.sigmoid(gates[:, 1 * H:2 * H])
        g = jnp.tanh(gates[:, 2 * H:3 * H])
        o = jax.nn.sigmoid(gates[:, 3 * H:4 * H])
        c_new = f * c_scr[...] + i * g                   # f32 elementwise (v5e-safe)
        c_scr[...] = c_new
        h_scr[...] = o * jnp.tanh(c_new)
        return carry

    lax.fori_loop(0, Tc, step, 0, unroll=True)

    # Fused FC head: out[b] = sum_{a,k} h[b*A+a,k]*W_h[a,k] + action[b]·W_a + bias
    @pl.when(tc == pl.num_programs(0) - 1)
    def _():
        h = h_scr[...]                                                   # (N, H)
        hb = jnp.dot(sel_ref[...], h * wfc_rows_ref[...],
                     preferred_element_type=jnp.float32)                 # (B, H)
        out_h = jnp.sum(hb, axis=-1, keepdims=True)                      # (B, 1)
        out_a = jnp.sum(act_ref[...] * wfca_ref[...], axis=-1, keepdims=True)
        out_ref[...] = out_h + out_a + bfc_ref[...]


# -----------------------------------------------------------------------------
# Full Critic forward (layout plumbing in plain JAX, all compute in Pallas)
# -----------------------------------------------------------------------------
def critic_forward(x, action, params, *, hidden, mxu_dtype=jnp.float32,
                   time_chunk=4, n_block_rows=8):
    B, A, T, I = x.shape
    N = B * A
    H = hidden
    G = 4 * H

    # (B, A, T, I) -> (N, T, I): free row-major view; no XLA transpose pass.
    x_nti = x.reshape(N, T, I).astype(jnp.float32)

    # Weights as MXU operands (bf16 halves DMA/VMEM on v6e/v7x); bias stays f32.
    w_ih_t = params["w_ih_t"].astype(mxu_dtype)     # (I, 4H)
    w_hh_t = params["w_hh_t"].astype(mxu_dtype)     # (H, 4H)
    bias = params["bias"].astype(jnp.float32)       # (1, 4H)

    # Kernel 1: all-timestep input projection (one big MXU matmul per N-chunk).
    gx = input_projection(x_nti, w_ih_t, bias, n_block_rows=n_block_rows)

    # FC-head parameter preprocessing (tiny, one-time, avoids in-kernel reshapes):
    wfc_rows = jnp.tile(params["w_fc_h"].reshape(A, H), (B, 1))   # (N, H)
    sel = (jnp.arange(B, dtype=jnp.int32)[:, None]
           == (jnp.arange(N, dtype=jnp.int32)[None, :] // A)).astype(jnp.float32)
    wfca = params["w_fc_a"].reshape(1, A).astype(jnp.float32)     # (1, A)
    bfc = params["b_fc"].astype(jnp.float32)                      # (1, 1)
    act = action.astype(jnp.float32)                              # (B, A)

    # Kernel 2: recurrence over streamed time chunks + fused FC epilogue.
    # NOTE(v7x): rows of N are independent through the LSTM; for very large N a
    # leading "parallel" N-chunk grid axis could additionally split work across
    # the two TensorCores.
    Tc = _pick_chunk(T, time_chunk, multiple=1)
    out = pl.pallas_call(
        _lstm_fc_kernel,
        out_shape=jax.ShapeDtypeStruct((B, 1), jnp.float32),
        grid=(T // Tc,),
        in_specs=[
            pl.BlockSpec((Tc, N, G), lambda t: (t, 0, 0)),   # streamed gate inputs
            pl.BlockSpec((H, G), lambda t: (0, 0)),          # W_hh (resident)
            pl.BlockSpec((N, H), lambda t: (0, 0)),          # fc hidden weights
            pl.BlockSpec((B, N), lambda t: (0, 0)),          # row->batch selector
            pl.BlockSpec((B, A), lambda t: (0, 0)),          # action
            pl.BlockSpec((1, A), lambda t: (0, 0)),          # fc action weights
            pl.BlockSpec((1, 1), lambda t: (0, 0)),          # fc bias
        ],
        out_specs=pl.BlockSpec((B, 1), lambda t: (0, 0)),
        scratch_shapes=[
            pltpu.VMEM((N, H), jnp.float32),   # h state (f32)
            pltpu.VMEM((N, H), jnp.float32),   # c state (f32)
        ],
        compiler_params=pltpu.CompilerParams(dimension_semantics=("arbitrary",)),
    )(gx, w_hh_t, wfc_rows, sel, act, wfca, bfc)
    return out  # (B, 1)


# -----------------------------------------------------------------------------
# Pure-JAX reference (mirrors PyTorch LSTM + Linear exactly) for validation.
# -----------------------------------------------------------------------------
def critic_reference(x, action, params, *, hidden):
    B, A, T, I = x.shape
    N = B * A
    H = hidden
    xs = jnp.transpose(x.reshape(N, T, I), (1, 0, 2)).astype(jnp.float32)

    def step(carry, x_t):
        h, c = carry
        gates = x_t @ params["w_ih_t"] + h @ params["w_hh_t"] + params["bias"]
        i = jax.nn.sigmoid(gates[:, 0 * H:1 * H])
        f = jax.nn.sigmoid(gates[:, 1 * H:2 * H])
        g = jnp.tanh(gates[:, 2 * H:3 * H])
        o = jax.nn.sigmoid(gates[:, 3 * H:4 * H])
        c = f * c + i * g
        h = o * jnp.tanh(c)
        return (h, c), None

    h0 = jnp.zeros((N, H), jnp.float32)
    c0 = jnp.zeros((N, H), jnp.float32)
    (h_last, _), _ = lax.scan(step, (h0, c0), xs)

    hcat = h_last.reshape(B, A * H)
    feat = jnp.concatenate([hcat, action.astype(jnp.float32)], axis=1)
    w_fc = jnp.concatenate([params["w_fc_h"], params["w_fc_a"]], axis=1)
    return feat @ w_fc.T + params["b_fc"]


# -----------------------------------------------------------------------------
def init_params(key, input_size, hidden_size, action_size):
    H = hidden_size
    k = jax.random.split(key, 6)
    scale = 1.0 / jnp.sqrt(H)
    w_ih = jax.random.uniform(k[0], (4 * H, input_size), jnp.float32, -scale, scale)
    w_hh = jax.random.uniform(k[1], (4 * H, H), jnp.float32, -scale, scale)
    b_ih = jax.random.uniform(k[2], (4 * H,), jnp.float32, -scale, scale)
    b_hh = jax.random.uniform(k[3], (4 * H,), jnp.float32, -scale, scale)
    fc_in = H * action_size + action_size
    fscale = 1.0 / jnp.sqrt(fc_in)
    w_fc = jax.random.uniform(k[4], (1, fc_in), jnp.float32, -fscale, fscale)
    b_fc = jax.random.uniform(k[5], (1,), jnp.float32, -fscale, fscale)
    return {
        "w_ih_t": w_ih.T,                          # (I, 4H)
        "w_hh_t": w_hh.T,                          # (H, 4H)
        "bias": (b_ih + b_hh).reshape(1, 4 * H),   # (1, 4H)
        "w_fc_h": w_fc[:, : H * action_size],      # (1, A*H)
        "w_fc_a": w_fc[:, H * action_size:],       # (1, A)
        "b_fc": b_fc.reshape(1, 1),                # (1, 1)
    }


if __name__ == "__main__":
    # hidden=128 so each LSTM gate is a lane-aligned 128-wide block of the fused
    # (N, 4H) gate tensor (no masked lane extraction in the recurrent loop).
    B, A, T, I, H = 4, 4, 8, 16, 128
    key = jax.random.PRNGKey(0)
    kx, ka, kp = jax.random.split(key, 3)

    x = jax.random.normal(kx, (B, A, T, I), jnp.float32)
    action = jax.random.normal(ka, (B, A), jnp.float32)
    params = init_params(kp, I, H, A)

    ref = jax.block_until_ready(critic_reference(x, action, params, hidden=H))

    # f32 MXU path (mirrors the PyTorch module's numerics).
    out = jax.block_until_ready(
        critic_forward(x, action, params, hidden=H, mxu_dtype=jnp.float32))
    assert out.shape == (B, 1), out.shape
    assert jnp.allclose(out, ref, atol=1e-2, rtol=1e-2), (out, ref)

    # bf16-weight MXU path (recommended on v6e/v7x); elementwise math stays f32,
    # so only MXU operand rounding differs from the f32 reference.
    out_bf16 = jax.block_until_ready(
        critic_forward(x, action, params, hidden=H, mxu_dtype=jnp.bfloat16))
    assert out_bf16.shape == (B, 1), out_bf16.shape
    assert jnp.allclose(out_bf16, ref, atol=8e-2, rtol=8e-2), (out_bf16, ref)

    print("KERNEL_OK")
</pallas_src>

<mosaic_0001>
module attributes {stable_mosaic.version = 11 : i64} {
  func.func @_proj_kernel(%arg0: i32, %arg1: memref<8x8x16xf32, #tpu.memory_space<vmem>>, %arg2: memref<16x512xf32, #tpu.memory_space<vmem>>, %arg3: memref<1x512xf32, #tpu.memory_space<vmem>>, %arg4: memref<8x8x512xf32, #tpu.memory_space<vmem>>) attributes {dimension_semantics = [#tpu.dimension_semantics<parallel>], iteration_bounds = array<i64: 2>, scalar_prefetch = 0 : i64, scratch_operands = 0 : i64, tpu.core_type = #tpu.core_type<tc>, window_params = [{transform_indices = @transform_0, window_bounds = array<i64: 8, 8, 16>}, {pipeline_mode = #tpu.pipeline_mode<synchronous>, transform_indices = @transform_1, window_bounds = array<i64: 16, 512>}, {pipeline_mode = #tpu.pipeline_mode<synchronous>, transform_indices = @transform_2, window_bounds = array<i64: 1, 512>}, {transform_indices = @transform_3, window_bounds = array<i64: 8, 8, 512>}]} {
    %c0 = arith.constant 0 : index
    %c0_0 = arith.constant 0 : index
    %c0_1 = arith.constant 0 : index
    %0 = vector.load %arg1[%c0, %c0_0, %c0_1] : memref<8x8x16xf32, #tpu.memory_space<vmem>>, vector<8x8x16xf32>
    %1 = vector.shape_cast %0 : vector<8x8x16xf32> to vector<64x16xf32>
    %c0_2 = arith.constant 0 : index
    %c0_3 = arith.constant 0 : index
    %2 = vector.load %arg2[%c0_2, %c0_3] : memref<16x512xf32, #tpu.memory_space<vmem>>, vector<16x512xf32>
    %cst = arith.constant dense<0.000000e+00> : vector<64x512xf32>
    %3 = tpu.matmul %1, %2, %cst {dimension_numbers = #tpu.dot_dimension_numbers<[1], [0], [0], [1], [0, 0, 1, 1], [], []>} : vector<64x16xf32>, vector<16x512xf32>, vector<64x512xf32> -> vector<64x512xf32>
    %c0_4 = arith.constant 0 : index
    %c0_5 = arith.constant 0 : index
    %4 = vector.load %arg3[%c0_4, %c0_5] : memref<1x512xf32, #tpu.memory_space<vmem>>, vector<1x512xf32>
    %5 = vector.broadcast %4 : vector<1x512xf32> to vector<64x512xf32>
    %6 = arith.addf %3, %5 : vector<64x512xf32>
    %7 = vector.shape_cast %6 : vector<64x512xf32> to vector<8x8x512xf32>
    %8 = vector.extract_strided_slice %7 {offsets = [0, 0, 0], sizes = [8, 1, 512], strides = [1, 1, 1]} : vector<8x8x512xf32> to vector<8x1x512xf32>
    %9 = vector.shape_cast %8 : vector<8x1x512xf32> to vector<8x512xf32>
    %c0_6 = arith.constant 0 : index
    %c0_7 = arith.constant 0 : index
    %c0_8 = arith.constant 0 : index
    %10 = vector.load %arg4[%c0_6, %c0_7, %c0_8] : memref<8x8x512xf32, #tpu.memory_space<vmem>>, vector<1x8x512xf32>
    %11 = vector.shape_cast %10 : vector<1x8x512xf32> to vector<8x512xf32>
    %12 = vector.shape_cast %9 : vector<8x512xf32> to vector<1x8x512xf32>
    tpu.vector_store %arg4[%c0_6, %c0_7, %c0_8], %12 {strides = array<i32>} : memref<8x8x512xf32, #tpu.memory_space<vmem>>, vector<1x8x512xf32>,
    %13 = vector.extract_strided_slice %7 {offsets = [0, 1, 0], sizes = [8, 1, 512], strides = [1, 1, 1]} : vector<8x8x512xf32> to vector<8x1x512xf32>
    %14 = vector.shape_cast %13 : vector<8x1x512xf32> to vector<8x512xf32>
    %c1 = arith.constant 1 : index
    %c0_9 = arith.constant 0 : index
    %c0_10 = arith.constant 0 : index
    %15 = vector.load %arg4[%c1, %c0_9, %c0_10] : memref<8x8x512xf32, #tpu.memory_space<vmem>>, vector<1x8x512xf32>
    %16 = vector.shape_cast %15 : vector<1x8x512xf32> to vector<8x512xf32>
    %17 = vector.shape_cast %14 : vector<8x512xf32> to vector<1x8x512xf32>
    tpu.vector_store %arg4[%c1, %c0_9, %c0_10], %17 {strides = array<i32>} : memref<8x8x512xf32, #tpu.memory_space<vmem>>, vector<1x8x512xf32>,
    %18 = vector.extract_strided_slice %7 {offsets = [0, 2, 0], sizes = [8, 1, 512], strides = [1, 1, 1]} : vector<8x8x512xf32> to vector<8x1x512xf32>
    %19 = vector.shape_cast %18 : vector<8x1x512xf32> to vector<8x512xf32>
    %c2 = arith.constant 2 : index
    %c0_11 = arith.constant 0 : index
    %c0_12 = arith.constant 0 : index
    %20 = vector.load %arg4[%c2, %c0_11, %c0_12] : memref<8x8x512xf32, #tpu.memory_space<vmem>>, vector<1x8x512xf32>
    %21 = vector.shape_cast %20 : vector<1x8x512xf32> to vector<8x512xf32>
    %22 = vector.shape_cast %19 : vector<8x512xf32> to vector<1x8x512xf32>
    tpu.vector_store %arg4[%c2, %c0_11, %c0_12], %22 {strides = array<i32>} : memref<8x8x512xf32, #tpu.memory_space<vmem>>, vector<1x8x512xf32>,
    %23 = vector.extract_strided_slice %7 {offsets = [0, 3, 0], sizes = [8, 1, 512], strides = [1, 1, 1]} : vector<8x8x512xf32> to vector<8x1x512xf32>
    %24 = vector.shape_cast %23 : vector<8x1x512xf32> to vector<8x512xf32>
    %c3 = arith.constant 3 : index
    %c0_13 = arith.constant 0 : index
    %c0_14 = arith.constant 0 : index
    %25 = vector.load %arg4[%c3, %c0_13, %c0_14] : memref<8x8x512xf32, #tpu.memory_space<vmem>>, vector<1x8x512xf32>
    %26 = vector.shape_cast %25 : vector<1x8x512xf32> to vector<8x512xf32>
    %27 = vector.shape_cast %24 : vector<8x512xf32> to vector<1x8x512xf32>
    tpu.vector_store %arg4[%c3, %c0_13, %c0_14], %27 {strides = array<i32>} : memref<8x8x512xf32, #tpu.memory_space<vmem>>, vector<1x8x512xf32>,
    %28 = vector.extract_strided_slice %7 {offsets = [0, 4, 0], sizes = [8, 1, 512], strides = [1, 1, 1]} : vector<8x8x512xf32> to vector<8x1x512xf32>
    %29 = vector.shape_cast %28 : vector<8x1x512xf32> to vector<8x512xf32>
    %c4 = arith.constant 4 : index
    %c0_15 = arith.constant 0 : index
    %c0_16 = arith.constant 0 : index
    %30 = vector.load %arg4[%c4, %c0_15, %c0_16] : memref<8x8x512xf32, #tpu.memory_space<vmem>>, vector<1x8x512xf32>
    %31 = vector.shape_cast %30 : vector<1x8x512xf32> to vector<8x512xf32>
    %32 = vector.shape_cast %29 : vector<8x512xf32> to vector<1x8x512xf32>
    tpu.vector_store %arg4[%c4, %c0_15, %c0_16], %32 {strides = array<i32>} : memref<8x8x512xf32, #tpu.memory_space<vmem>>, vector<1x8x512xf32>,
    %33 = vector.extract_strided_slice %7 {offsets = [0, 5, 0], sizes = [8, 1, 512], strides = [1, 1, 1]} : vector<8x8x512xf32> to vector<8x1x512xf32>
    %34 = vector.shape_cast %33 : vector<8x1x512xf32> to vector<8x512xf32>
    %c5 = arith.constant 5 : index
    %c0_17 = arith.constant 0 : index
    %c0_18 = arith.constant 0 : index
    %35 = vector.load %arg4[%c5, %c0_17, %c0_18] : memref<8x8x512xf32, #tpu.memory_space<vmem>>, vector<1x8x512xf32>
    %36 = vector.shape_cast %35 : vector<1x8x512xf32> to vector<8x512xf32>
    %37 = vector.shape_cast %34 : vector<8x512xf32> to vector<1x8x512xf32>
    tpu.vector_store %arg4[%c5, %c0_17, %c0_18], %37 {strides = array<i32>} : memref<8x8x512xf32, #tpu.memory_space<vmem>>, vector<1x8x512xf32>,
    %38 = vector.extract_strided_slice %7 {offsets = [0, 6, 0], sizes = [8, 1, 512], strides = [1, 1, 1]} : vector<8x8x512xf32> to vector<8x1x512xf32>
    %39 = vector.shape_cast %38 : vector<8x1x512xf32> to vector<8x512xf32>
    %c6 = arith.constant 6 : index
    %c0_19 = arith.constant 0 : index
    %c0_20 = arith.constant 0 : index
    %40 = vector.load %arg4[%c6, %c0_19, %c0_20] : memref<8x8x512xf32, #tpu.memory_space<vmem>>, vector<1x8x512xf32>
    %41 = vector.shape_cast %40 : vector<1x8x512xf32> to vector<8x512xf32>
    %42 = vector.shape_cast %39 : vector<8x512xf32> to vector<1x8x512xf32>
    tpu.vector_store %arg4[%c6, %c0_19, %c0_20], %42 {strides = array<i32>} : memref<8x8x512xf32, #tpu.memory_space<vmem>>, vector<1x8x512xf32>,
    %43 = vector.extract_strided_slice %7 {offsets = [0, 7, 0], sizes = [8, 1, 512], strides = [1, 1, 1]} : vector<8x8x512xf32> to vector<8x1x512xf32>
    %44 = vector.shape_cast %43 : vector<8x1x512xf32> to vector<8x512xf32>
    %c7 = arith.constant 7 : index
    %c0_21 = arith.constant 0 : index
    %c0_22 = arith.constant 0 : index
    %45 = vector.load %arg4[%c7, %c0_21, %c0_22] : memref<8x8x512xf32, #tpu.memory_space<vmem>>, vector<1x8x512xf32>
    %46 = vector.shape_cast %45 : vector<1x8x512xf32> to vector<8x512xf32>
    %47 = vector.shape_cast %44 : vector<8x512xf32> to vector<1x8x512xf32>
    tpu.vector_store %arg4[%c7, %c0_21, %c0_22], %47 {strides = array<i32>} : memref<8x8x512xf32, #tpu.memory_space<vmem>>, vector<1x8x512xf32>,
    return
  }
  func.func @transform_0(%arg0: i32) -> (i32, i32, i32) {
    %c0_i32 = arith.constant 0 : i32
    %c0_i32_0 = arith.constant 0 : i32
    %c0_i32_1 = arith.constant 0 : i32
    return %arg0, %c0_i32, %c0_i32_0 : i32, i32, i32
  }
  func.func @transform_1(%arg0: i32) -> (i32, i32) {
    %c0_i32 = arith.constant 0 : i32
    %c0_i32_0 = arith.constant 0 : i32
    %c0_i32_1 = arith.constant 0 : i32
    return %c0_i32, %c0_i32_0 : i32, i32
  }
  func.func @transform_2(%arg0: i32) -> (i32, i32) {
    %c0_i32 = arith.constant 0 : i32
    %c0_i32_0 = arith.constant 0 : i32
    %c0_i32_1 = arith.constant 0 : i32
    return %c0_i32, %c0_i32_0 : i32, i32
  }
  func.func @transform_3(%arg0: i32) -> (i32, i32, i32) {
    %c0_i32 = arith.constant 0 : i32
    %c0_i32_0 = arith.constant 0 : i32
    %c0_i32_1 = arith.constant 0 : i32
    return %c0_i32, %arg0, %c0_i32_0 : i32, i32, i32
  }
}

</mosaic_0001>

<llo_original>
// kernel: tpu_custom_call.1
$region0: #{tpu_custom_call.1}
  #allocation0 [shape = 'u32[]', space=smem, size = 0x4, offset = 0x4, fixed_abs, tag = 'smem constant byte address 0x4 - core index']
  #allocation1 [shape = 'u32[144,128]{1,0:T(1,128)}', space=vmem, size = 0x12000, scoped, tag = 'internal scratch']
  %s0 = inlined_call_operand.hbm [shape: f32[16,8,16], index: 0, kind: input, shape index: {}]
  %s1 = inlined_call_operand.hbm [shape: f32[16,512], index: 1, kind: input, shape index: {}]
  %s2 = inlined_call_operand.vmem [shape: f32[1,512], index: 2, kind: input, shape index: {}]
  %s3 = inlined_call_operand.hbm [shape: f32[8,16,512], index: 3, kind: output, shape index: {}]
  %s4 = sld [smem:[#allocation0]]
  $region53: #{tpu_custom_call.1} parent=0
    _
  %s6 = ssub.s32 1, %s4
  %s7 = scalar_select 0, %s6, %s4
  $region1: #{tpu_custom_call.1} parent=0
    #allocation2 [shape = 'u8[65536]{0}', space=vmem, size = 0x10000, scoped, tag = 'input window, operand 0']
    #allocation3 [shape = 's32[2]{0}', space=sflag, size = 0x8, scoped, tag = 'scoped memory for tpu_custom_call.1']
    #allocation4 [shape = 's32[2]{0}', space=sflag, size = 0x8, scoped, tag = 'scoped memory for tpu_custom_call.1']
    #allocation5 [shape = 'u8[32768]{0}', space=vmem, size = 0x8000, scoped, tag = 'input window, operand 1, single buffered']
    #allocation6 [shape = 's32[1]{0}', space=sflag, size = 0x4, scoped, tag = 'scoped memory for tpu_custom_call.1']
    #allocation7 [shape = 'u8[262144]{0}', space=vmem, size = 0x40000, scoped, tag = 'output window, operand 0']
    %8 = vsyncpa [#allocation3], 0
    %s9 = scalar_lea.sflag [#allocation3], 1
    %10 = vsyncpa %s9, 0
    %11 = vsyncpa [#allocation6], 0
    %12 = vsyncpa [#allocation4], 0
    %s13 = scalar_lea.sflag [#allocation4], 1
    %14 = vsyncpa %s13, 0
    loop: start=0, step=1, limit=4
    $region2: #{tpu_custom_call.1} parent=1 // loop_pre_header
      _
    $region3: #{tpu_custom_call.1} parent=1 // loop_header
      %s16 = sphi 0, %s20
      %p17 = scmp.ge.s32.totalorder %s16, 4
      %s26 = sphi 0, %s28
      %s29 = sphi 0, %s26
      %s30 = sphi 0, %s29
      %s46 = sphi 0, %s30
      %s50 = sphi 0, %s50
      %s52 = sphi 0, %s50
      %s53 = sphi 0, %s52
      %s67 = sphi 0, %s53
      %s71 = sphi 0, %s71
      %s73 = sphi 0, %s71
      %s74 = sphi 0, %s73
      %s88 = sphi 0, %s74
      %s94 = sphi 0, %s96
      %s97 = sphi 0, %s94
      %s98 = sphi 0, %s97
      %s114 = sphi 0, %s98
    $region4: #{tpu_custom_call.1} parent=1 // loop_header_branch
      %19 = sbr.rel (%p17) target = $region8
    $region5: #{tpu_custom_call.1} parent=1 // loop_body
      %s21 = ssub.s32 %s16, 1
      %s22 = ssub.s32 %s16, 2
      %s23 = sadd.s32 %s16, 1
      %s24 = ssub.s32 %s16, %s23
      %p25 = scmp.eq.s32.totalorder %s24, 0
      %s27 = sadd.s32 %s26, 1
      %s28 = scalar_select %p25, %s26, %s27
      %p31 = pneg %p25
      %p32 = scmp.eq.s32.totalorder %s16, 1
      %p33 = por %p31, %p32
      %p34 = scmp.ne.s32.totalorder %s26, %s29
      %p35 = scmp.eq.s32.totalorder %s16, 0
      %p36 = por %p34, %p35
      %p37 = scmp.ne.s32.totalorder %s26, %s29
      %p38 = scmp.eq.s32.totalorder %s21, 1
      %p39 = por %p37, %p38
      %p40 = scmp.ne.s32.totalorder %s29, %s30
      %p41 = scmp.eq.s32.totalorder %s21, 0
      %p42 = por %p40, %p41
      %p43 = scmp.ne.s32.totalorder %s29, %s30
      %p44 = scmp.eq.s32.totalorder %s22, 1
      %p45 = por %p43, %p44
      %p47 = scmp.ne.s32.totalorder %s30, %s46
      %p48 = scmp.eq.s32.totalorder %s22, 0
      %p49 = por %p47, %p48
      %s51 = sadd.s32 %s50, 1
      %p54 = scmp.eq.s32.totalorder %s16, 1
      %p55 = scmp.ne.s32.totalorder %s50, %s52
      %p56 = scmp.eq.s32.totalorder %s16, 0
      %p57 = por %p55, %p56
      %p58 = scmp.ne.s32.totalorder %s50, %s52
      %p59 = scmp.eq.s32.totalorder %s21, 1
      %p60 = por %p58, %p59
      %p61 = scmp.ne.s32.totalorder %s52, %s53
      %p62 = scmp.eq.s32.totalorder %s21, 0
      %p63 = por %p61, %p62
      %p64 = scmp.ne.s32.totalorder %s52, %s53
      %p65 = scmp.eq.s32.totalorder %s22, 1
      %p66 = por %p64, %p65
      %p68 = scmp.ne.s32.totalorder %s53, %s67
      %p69 = scmp.eq.s32.totalorder %s22, 0
      %p70 = por %p68, %p69
      %s72 = sadd.s32 %s71, 1
      %p75 = scmp.eq.s32.totalorder %s16, 1
      %p76 = scmp.ne.s32.totalorder %s71, %s73
      %p77 = scmp.eq.s32.totalorder %s16, 0
      %p78 = por %p76, %p77
      %p79 = scmp.ne.s32.totalorder %s71, %s73
      %p80 = scmp.eq.s32.totalorder %s21, 1
      %p81 = por %p79, %p80
      %p82 = scmp.ne.s32.totalorder %s73, %s74
      %p83 = scmp.eq.s32.totalorder %s21, 0
      %p84 = por %p82, %p83
      %p85 = scmp.ne.s32.totalorder %s73, %s74
      %p86 = scmp.eq.s32.totalorder %s22, 1
      %p87 = por %p85, %p86
      %p89 = scmp.ne.s32.totalorder %s74, %s88
      %p90 = scmp.eq.s32.totalorder %s22, 0
      %p91 = por %p89, %p90
      %s92 = ssub.s32 %s16, %s23
      %p93 = scmp.eq.s32.totalorder %s92, 0
      %s95 = sadd.s32 %s94, 1
      %s96 = scalar_select %p93, %s94, %s95
      %p99 = pneg %p93
      %p100 = scmp.eq.s32.totalorder %s16, 1
      %p101 = por %p99, %p100
      %p102 = scmp.ne.s32.totalorder %s94, %s97
      %p103 = scmp.eq.s32.totalorder %s16, 0
      %p104 = por %p102, %p103
      %p105 = scmp.ne.s32.totalorder %s94, %s97
      %p106 = scmp.eq.s32.totalorder %s21, 1
      %p107 = por %p105, %p106
      %p108 = scmp.ne.s32.totalorder %s97, %s98
      %p109 = scmp.eq.s32.totalorder %s21, 0
      %p110 = por %p108, %p109
      %p111 = scmp.ne.s32.totalorder %s97, %s98
      %p112 = scmp.eq.s32.totalorder %s22, 1
      %p113 = por %p111, %p112
      %p115 = scmp.ne.s32.totalorder %s98, %s114
      %p116 = scmp.eq.s32.totalorder %s22, 0
      %p117 = por %p115, %p116
      %p118 = scmp.le.s32.totalorder 1, %s16
      %p119 = scmp.lt.s32.totalorder %s16, 3
      %p120 = pnand %p118, %p119
      %p121 = pneg %p120
      // Predicated region
      $region9: #{tpu_custom_call.1} parent=5 // pred_check
        _
      $region10: #{tpu_custom_call.1} parent=5 // pred_check_branch
        %123 = sbr.rel (%p120) target = $region12
      $region11: #{tpu_custom_call.1} parent=5 // pred_region
        %s124 = ssub.s32 %s16, 1
        // Predicated region
        $region13: #{tpu_custom_call.1} parent=11 // pred_check
          %p125 = pneg %p63
        $region14: #{tpu_custom_call.1} parent=11 // pred_check_branch
          %127 = sbr.rel (%p125) target = $region16
        $region15: #{tpu_custom_call.1} parent=11 // pred_region
          %s129 = ssub.s32 1024, 1024
          %130 = vsyncadd [#allocation6], %s129
          %s131 = sshll.u32 [#allocation5], 4
          %s132 = int_to_ptr.vmem [resolvable:$true] %s131
          %137 = dma.hbm_to_vmem [thread:$0]  %s1, 1024, %s132, [#allocation6], 512, 512, 32
        $region16: #{tpu_custom_call.1} parent=11 // pred_fallthru
          _
        // Predicated region
        $region17: #{tpu_custom_call.1} parent=11 // pred_check
          %p138 = pneg %p84
        $region18: #{tpu_custom_call.1} parent=11 // pred_check_branch
          %140 = sbr.rel (%p138) target = $region20
        $region19: #{tpu_custom_call.1} parent=11 // pred_region
          _
        $region20: #{tpu_custom_call.1} parent=11 // pred_fallthru
          _
      $region12: #{tpu_custom_call.1} parent=5 // pred_fallthru
        _
      %p141 = scmp.lt.s32.totalorder %s16, 2
      // Predicated region
      $region21: #{tpu_custom_call.1} parent=5 // pred_check
        %p142 = pneg %p141
      $region22: #{tpu_custom_call.1} parent=5 // pred_check_branch
        %144 = sbr.rel (%p142) target = $region24
      $region23: #{tpu_custom_call.1} parent=5 // pred_region
        // Predicated region
        $region25: #{tpu_custom_call.1} parent=23 // pred_check
          %p145 = pneg %p36
        $region26: #{tpu_custom_call.1} parent=23 // pred_check_branch
          %147 = sbr.rel (%p145) target = $region28
        $region27: #{tpu_custom_call.1} parent=23 // pred_region
          %s148 = sand.u32 %s26, 1
          %s149 = scalar_lea.sflag [#allocation3], %s148
          %s150 = sand.u32 %s26, 1
          %s151 = smul.addr %s150, 64
          %s152 = scalar_lea.vmem [#allocation2], %s151
          %s153 = smul.u32 8, %s16
          %s155 = ssub.s32 1024, 1024
          %156 = vsyncadd %s149, %s155
          %s157 = smul.addr %s153, 128
          %s158 = scalar_lea.hbm %s0, %s157
          %s159 = sshll.u32 %s152, 4
          %s160 = int_to_ptr.vmem [resolvable:$true] %s159
          %165 = dma.hbm_to_vmem [thread:$0]  %s158, 1024, %s160, %s149, 128, 128, 8
        $region28: #{tpu_custom_call.1} parent=23 // pred_fallthru
          _
      $region24: #{tpu_custom_call.1} parent=5 // pred_fallthru
        _
      %p166 = scmp.le.s32.totalorder 1, %s16
      %p167 = scmp.lt.s32.totalorder %s16, 3
      %p168 = pnand %p166, %p167
      %p169 = pneg %p168
      // Predicated region
      $region29: #{tpu_custom_call.1} parent=5 // pred_check
        _
      $region30: #{tpu_custom_call.1} parent=5 // pred_check_branch
        %171 = sbr.rel (%p168) target = $region32
      $region31: #{tpu_custom_call.1} parent=5 // pred_region
        %s172 = ssub.s32 %s16, 1
        %s173 = sand.u32 %s29, 1
        %s174 = scalar_lea.sflag [#allocation3], %s173
        %s175 = sand.u32 %s29, 1
        %s176 = smul.addr %s175, 64
        %s177 = scalar_lea.vmem [#allocation2], %s176
        // Predicated region
        $region33: #{tpu_custom_call.1} parent=31 // pred_check
          %p178 = pneg %p42
        $region34: #{tpu_custom_call.1} parent=31 // pred_check_branch
          %180 = sbr.rel (%p178) target = $region36
        $region35: #{tpu_custom_call.1} parent=31 // pred_region
          %181 = dma.done %s174, 1024
        $region36: #{tpu_custom_call.1} parent=31 // pred_fallthru
          _
        // Predicated region
        $region37: #{tpu_custom_call.1} parent=31 // pred_check
          %p182 = pneg %p63
        $region38: #{tpu_custom_call.1} parent=31 // pred_check_branch
          %184 = sbr.rel (%p182) target = $region40
        $region39: #{tpu_custom_call.1} parent=31 // pred_region
          %185 = dma.done [#allocation6], 1024
        $region40: #{tpu_custom_call.1} parent=31 // pred_fallthru
          _
        %s186 = sand.u32 %s29, 1
        %s187 = scalar_lea.sflag [#allocation3], %s186
        %s188 = sand.u32 %s29, 1
        %s189 = smul.addr %s188, 64
        %s190 = scalar_lea.vmem [#allocation2], %s189
        %p191 = pneg %p42
        %p192 = pneg %p39
        %p193 = pneg %p63
        %p194 = pneg %p60
        %p195 = pneg %p84
        %p196 = pneg %p81
        %p197 = pneg %p110
        %p198 = pneg %p107
        %s199 = sand.u32 %s97, 1
        %s200 = scalar_lea.sflag [#allocation4], %s199
        %s201 = sand.u32 %s97, 1
        %s202 = smul.addr %s201, 256
        %s203 = scalar_lea.vmem [#allocation7], %s202
        %s204 = smul.u32 8, %s21
        %v205 = vld [vmem:[%s177] sm:$0xff]
        %v206 = vld [vmem:[%s177 + $0x8] sm:$0xff]
        %v207 = vld [vmem:[%s177 + $0x10] sm:$0xff]
        %v208 = vld [vmem:[%s177 + $0x18] sm:$0xff]
        %v209 = vld [vmem:[%s177 + $0x20] sm:$0xff]
        %v210 = vld [vmem:[%s177 + $0x28] sm:$0xff]
        %v211 = vld [vmem:[%s177 + $0x30] sm:$0xff]
        %v212 = vld [vmem:[%s177 + $0x38] sm:$0xff]
        %v213 = vld [vmem:[#allocation5] sm:$0xff]
        %v214 = vld [vmem:[#allocation5 + $0x8] sm:$0xff]
        %v215 = vld [vmem:[#allocation5 + $0x10] sm:$0xff]
        %v216 = vld [vmem:[#allocation5 + $0x18] sm:$0xff]
        %v217 = vld [vmem:[#allocation5 + $0x20] sm:$0xff]
        %v218 = vld [vmem:[#allocation5 + $0x28] sm:$0xff]
        %v219 = vld [vmem:[#allocation5 + $0x30] sm:$0xff]
        %v220 = vld [vmem:[#allocation5 + $0x38] sm:$0xff]
        %v221 = vld [vmem:[%s2] sm:$0xf]
        %v223 = vlaneseq
        %v224 = vshrl.u32 %v223, 7
        %v225 = vsub.s32 0, %v224
        %v226 = vrot.slane %v221, %v225
        %v227 = vlaneseq
        %v228 = vshrl.u32 %v227, 7
        %v229 = vsub.s32 1, %v228
        %v230 = vrot.slane %v221, %v229
        %v231 = vlaneseq
        %v232 = vshrl.u32 %v231, 7
        %v233 = vsub.s32 2, %v232
        %v234 = vrot.slane %v221, %v233
        %v235 = vlaneseq
        %v236 = vshrl.u32 %v235, 7
        %v237 = vsub.s32 3, %v236
        %v238 = vrot.slane %v221, %v237
        %vm243 = vcmask 130048
        %v245 = vsel %vm243, %v205, 0
        %v248 = vsel %vm243, %v206, 0
        %v251 = vsel %vm243, %v207, 0
        %v254 = vsel %vm243, %v208, 0
        %v257 = vsel %vm243, %v209, 0
        %v260 = vsel %vm243, %v210, 0
        %v263 = vsel %vm243, %v211, 0
        %v266 = vsel %vm243, %v212, 0
        %268 = vmatprep.subr.mxu0 %v214
        %269 = vmatpush1.msra.mxu0 %v213
        %270 = vmatprep.subr.mxu0 %v218
        %271 = vmatpush1.msra.mxu0 %v217
        %272 = vmatprep.subr.mxu0 0.0
        %273 = vmatpush1.msra.mxu0 0.0
        %274 = vmatprep.subr.mxu0 0.0
        %275 = vmatpush1.msra.mxu0 0.0
        %276 = vmatprep.subr.mxu0 0.0
        %277 = vmatpush1.msra.mxu0 0.0
        %278 = vmatprep.subr.mxu0 0.0
        %279 = vmatpush1.msra.mxu0 0.0
        %280 = vmatprep.subr.mxu0 0.0
        %281 = vmatpush1.msra.mxu0 0.0
        %282 = vmatprep.subr.mxu0 0.0
        %283 = vmatpush1.msra.mxu0 0.0
        %284 = vmatprep.subr.mxu0 0.0
        %285 = vmatpush1.msra.mxu0 0.0
        %286 = vmatprep.subr.mxu0 0.0
        %287 = vmatpush1.msra.mxu0 0.0
        %288 = vmatprep.subr.mxu0 0.0
        %289 = vmatpush1.msra.mxu0 0.0
        %290 = vmatprep.subr.mxu0 0.0
        %291 = vmatpush1.msra.mxu0 0.0
        %292 = vmatprep.subr.mxu0 0.0
        %293 = vmatpush1.msra.mxu0 0.0
        %294 = vmatprep.subr.mxu0 0.0
        %295 = vmatpush1.msra.mxu0 0.0
        %296 = vmatprep.subr.mxu0 0.0
        %297 = vmatpush1.msra.mxu0 0.0
        %298 = vmatprep.subr.mxu0 0.0
        %299 = vmatpush1.msra.mxu0 0.0
        %300 = vmatprep.subr.mxu0 0.0
        %301 = vmatpush1.msra.mxu0 0.0
        %302 = vmatprep.subr.mxu0 0.0
        %303 = vmatpush1.msra.mxu0 0.0
        %304 = vmatprep.subr.mxu0 0.0
        %305 = vmatpush1.msra.mxu0 0.0
        %306 = vmatprep.subr.mxu0 0.0
        %307 = vmatpush1.msra.mxu0 0.0
        %308 = vmatprep.subr.mxu0 0.0
        %309 = vmatpush1.msra.mxu0 0.0
        %310 = vmatprep.subr.mxu0 0.0
        %311 = vmatpush1.msra.mxu0 0.0
        %312 = vmatprep.subr.mxu0 0.0
        %313 = vmatpush1.msra.mxu0 0.0
        %314 = vmatprep.subr.mxu0 0.0
        %315 = vmatpush1.msra.mxu0 0.0
        %316 = vmatprep.subr.mxu0 0.0
        %317 = vmatpush1.msra.mxu0 0.0
        %318 = vmatprep.subr.mxu0 0.0
        %319 = vmatpush1.msra.mxu0 0.0
        %320 = vmatprep.subr.mxu0 0.0
        %321 = vmatpush1.msra.mxu0 0.0
        %322 = vmatprep.subr.mxu0 0.0
        %323 = vmatpush1.msra.mxu0 0.0
        %324 = vmatprep.subr.mxu0 0.0
        %325 = vmatpush1.msra.mxu0 0.0
        %326 = vmatprep.subr.mxu0 0.0
        %327 = vmatpush1.msra.mxu0 0.0
        %328 = vmatprep.subr.mxu0 0.0
        %329 = vmatpush1.msra.mxu0 0.0
        %330 = vmatprep.subr.mxu0 0.0
        %331 = vmatpush1.msra.mxu0 0.0
        %332 = vmatprep.mubr.f32.mxu0 0.0
        %333 = vmatmul.mubr.f32.gmra.mrb[0].mxu0 %v245
        %v334 = vpop.f32.mrb[0].mxu0
        %v335 = vadd.f32 %v226, %v334
        %v336 = vpop.f32.mrb[0].mxu0
        %v337 = vadd.f32 %v230, %v336
        %338 = vmatprep.mubr.f32.mxu0 0.0
        %339 = vmatmul.mubr.f32.gmra.mrb[0].mxu0 %v248
        %v340 = vpop.f32.mrb[0].mxu0
        %v341 = vadd.f32 %v226, %v340
        %v342 = vpop.f32.mrb[0].mxu0
        %v343 = vadd.f32 %v230, %v342
        %344 = vmatprep.mubr.f32.mxu0 0.0
        %345 = vmatmul.mubr.f32.gmra.mrb[0].mxu0 %v251
        %v346 = vpop.f32.mrb[0].mxu0
        %v347 = vadd.f32 %v226, %v346
        %v348 = vpop.f32.mrb[0].mxu0
        %v349 = vadd.f32 %v230, %v348
        %350 = vmatprep.mubr.f32.mxu0 0.0
        %351 = vmatmul.mubr.f32.gmra.mrb[0].mxu0 %v254
        %v352 = vpop.f32.mrb[0].mxu0
        %v353 = vadd.f32 %v226, %v352
        %v354 = vpop.f32.mrb[0].mxu0
        %v355 = vadd.f32 %v230, %v354
        %356 = vmatprep.mubr.f32.mxu0 0.0
        %357 = vmatmul.mubr.f32.gmra.mrb[0].mxu0 %v257
        %v358 = vpop.f32.mrb[0].mxu0
        %v359 = vadd.f32 %v226, %v358
        %v360 = vpop.f32.mrb[0].mxu0
        %v361 = vadd.f32 %v230, %v360
        %362 = vmatprep.mubr.f32.mxu0 0.0
        %363 = vmatmul.mubr.f32.gmra.mrb[0].mxu0 %v260
        %v364 = vpop.f32.mrb[0].mxu0
        %v365 = vadd.f32 %v226, %v364
        %v366 = vpop.f32.mrb[0].mxu0
        %v367 = vadd.f32 %v230, %v366
        %368 = vmatprep.mubr.f32.mxu0 0.0
        %369 = vmatmul.mubr.f32.gmra.mrb[0].mxu0 %v263
        %v370 = vpop.f32.mrb[0].mxu0
        %v371 = vadd.f32 %v226, %v370
        %v372 = vpop.f32.mrb[0].mxu0
        %v373 = vadd.f32 %v230, %v372
        %374 = vmatprep.mubr.f32.mxu0 0.0
        %375 = vmatmul.mubr.f32.gmra.mrb[0].mxu0 %v266
        %v376 = vpop.f32.mrb[0].mxu0
        %v377 = vadd.f32 %v226, %v376
        %v378 = vpop.f32.mrb[0].mxu0
        %v379 = vadd.f32 %v230, %v378
        %380 = vdwg.mxu0
        %381 = vmatprep.subr.mxu0 %v216
        %382 = vmatpush1.msra.mxu0 %v215
        %383 = vmatprep.subr.mxu0 %v220
        %384 = vmatpush1.msra.mxu0 %v219
        %385 = vmatprep.subr.mxu0 0.0
        %386 = vmatpush1.msra.mxu0 0.0
        %387 = vmatprep.subr.mxu0 0.0
        %388 = vmatpush1.msra.mxu0 0.0
        %389 = vmatprep.subr.mxu0 0.0
        %390 = vmatpush1.msra.mxu0 0.0
        %391 = vmatprep.subr.mxu0 0.0
        %392 = vmatpush1.msra.mxu0 0.0
        %393 = vmatprep.subr.mxu0 0.0
        %394 = vmatpush1.msra.mxu0 0.0
        %395 = vmatprep.subr.mxu0 0.0
        %396 = vmatpush1.msra.mxu0 0.0
        %397 = vmatprep.subr.mxu0 0.0
        %398 = vmatpush1.msra.mxu0 0.0
        %399 = vmatprep.subr.mxu0 0.0
        %400 = vmatpush1.msra.mxu0 0.0
        %401 = vmatprep.subr.mxu0 0.0
        %402 = vmatpush1.msra.mxu0 0.0
        %403 = vmatprep.subr.mxu0 0.0
        %404 = vmatpush1.msra.mxu0 0.0
        %405 = vmatprep.subr.mxu0 0.0
        %406 = vmatpush1.msra.mxu0 0.0
        %407 = vmatprep.subr.mxu0 0.0
        %408 = vmatpush1.msra.mxu0 0.0
        %409 = vmatprep.subr.mxu0 0.0
        %410 = vmatpush1.msra.mxu0 0.0
        %411 = vmatprep.subr.mxu0 0.0
        %412 = vmatpush1.msra.mxu0 0.0
        %413 = vmatprep.subr.mxu0 0.0
        %414 = vmatpush1.msra.mxu0 0.0
        %415 = vmatprep.subr.mxu0 0.0
        %416 = vmatpush1.msra.mxu0 0.0
        %417 = vmatprep.subr.mxu0 0.0
        %418 = vmatpush1.msra.mxu0 0.0
        %419 = vmatprep.subr.mxu0 0.0
        %420 = vmatpush1.msra.mxu0 0.0
        %421 = vmatprep.subr.mxu0 0.0
        %422 = vmatpush1.msra.mxu0 0.0
        %423 = vmatprep.subr.mxu0 0.0
        %424 = vmatpush1.msra.mxu0 0.0
        %425 = vmatprep.subr.mxu0 0.0
        %426 = vmatpush1.msra.mxu0 0.0
        %427 = vmatprep.subr.mxu0 0.0
        %428 = vmatpush1.msra.mxu0 0.0
        %429 = vmatprep.subr.mxu0 0.0
        %430 = vmatpush1.msra.mxu0 0.0
        %431 = vmatprep.subr.mxu0 0.0
        %432 = vmatpush1.msra.mxu0 0.0
        %433 = vmatprep.subr.mxu0 0.0
        %434 = vmatpush1.msra.mxu0 0.0
        %435 = vmatprep.subr.mxu0 0.0
        %436 = vmatpush1.msra.mxu0 0.0
        %437 = vmatprep.subr.mxu0 0.0
        %438 = vmatpush1.msra.mxu0 0.0
        %439 = vmatprep.subr.mxu0 0.0
        %440 = vmatpush1.msra.mxu0 0.0
        %441 = vmatprep.subr.mxu0 0.0
        %442 = vmatpush1.msra.mxu0 0.0
        %443 = vmatprep.subr.mxu0 0.0
        %444 = vmatpush1.msra.mxu0 0.0
        %445 = vmatprep.mubr.f32.mxu0 0.0
        %446 = vmatmul.mubr.f32.gmra.mrb[0].mxu0 %v245
        %v447 = vpop.f32.mrb[0].mxu0
        %v448 = vadd.f32 %v234, %v447
        %v449 = vpop.f32.mrb[0].mxu0
        %v450 = vadd.f32 %v238, %v449
        %451 = vmatprep.mubr.f32.mxu0 0.0
        %452 = vmatmul.mubr.f32.gmra.mrb[0].mxu0 %v248
        %v453 = vpop.f32.mrb[0].mxu0
        %v454 = vadd.f32 %v234, %v453
        %v455 = vpop.f32.mrb[0].mxu0
        %v456 = vadd.f32 %v238, %v455
        %457 = vmatprep.mubr.f32.mxu0 0.0
        %458 = vmatmul.mubr.f32.gmra.mrb[0].mxu0 %v251
        %v459 = vpop.f32.mrb[0].mxu0
        %v460 = vadd.f32 %v234, %v459
        %v461 = vpop.f32.mrb[0].mxu0
        %v462 = vadd.f32 %v238, %v461
        %463 = vmatprep.mubr.f32.mxu0 0.0
        %464 = vmatmul.mubr.f32.gmra.mrb[0].mxu0 %v254
        %v465 = vpop.f32.mrb[0].mxu0
        %v466 = vadd.f32 %v234, %v465
        %v467 = vpop.f32.mrb[0].mxu0
        %v468 = vadd.f32 %v238, %v467
        %469 = vmatprep.mubr.f32.mxu0 0.0
        %470 = vmatmul.mubr.f32.gmra.mrb[0].mxu0 %v257
        %v471 = vpop.f32.mrb[0].mxu0
        %v472 = vadd.f32 %v234, %v471
        %v473 = vpop.f32.mrb[0].mxu0
        %v474 = vadd.f32 %v238, %v473
        %475 = vmatprep.mubr.f32.mxu0 0.0
        %476 = vmatmul.mubr.f32.gmra.mrb[0].mxu0 %v260
        %v477 = vpop.f32.mrb[0].mxu0
        %v478 = vadd.f32 %v234, %v477
        %v479 = vpop.f32.mrb[0].mxu0
        %v480 = vadd.f32 %v238, %v479
        %481 = vmatprep.mubr.f32.mxu0 0.0
        %482 = vmatmul.mubr.f32.gmra.mrb[0].mxu0 %v263
        %v483 = vpop.f32.mrb[0].mxu0
        %v484 = vadd.f32 %v234, %v483
        %v485 = vpop.f32.mrb[0].mxu0
        %v486 = vadd.f32 %v238, %v485
        %487 = vmatprep.mubr.f32.mxu0 0.0
        %488 = vmatmul.mubr.f32.gmra.mrb[0].mxu0 %v266
        %v489 = vpop.f32.mrb[0].mxu0
        %v490 = vadd.f32 %v234, %v489
        %v491 = vpop.f32.mrb[0].mxu0
        %v492 = vadd.f32 %v238, %v491
        %493 = vdwg.mxu0
        %v526 = vrot.slane %v341, 7
        %vm527 = vcmask 1041409
        %v528 = vsel %vm527, %v526, %v335
        %v529 = vrot.slane %v347, 6
        %vm530 = vcmask 1042434
        %v531 = vsel %vm530, %v529, %v528
        %v532 = vrot.slane %v353, 5
        %vm533 = vcmask 1043459
        %v534 = vsel %vm533, %v532, %v531
        %v535 = vrot.slane %v359, 4
        %vm536 = vcmask 1044484
        %v537 = vsel %vm536, %v535, %v534
        %v538 = vrot.slane %v365, 3
        %vm539 = vcmask 1045509
        %v540 = vsel %vm539, %v538, %v537
        %v541 = vrot.slane %v371, 2
        %vm542 = vcmask 1046534
        %v543 = vsel %vm542, %v541, %v540
        %v544 = vrot.slane %v377, 1
        %vm545 = vcmask 1047559
        %v546 = vsel %vm545, %v544, %v543
        %v547 = vrot.slane %v343, 7
        %v548 = vsel %vm527, %v547, %v337
        %v549 = vrot.slane %v349, 6
        %v550 = vsel %vm530, %v549, %v548
        %v551 = vrot.slane %v355, 5
        %v552 = vsel %vm533, %v551, %v550
        %v553 = vrot.slane %v361, 4
        %v554 = vsel %vm536, %v553, %v552
        %v555 = vrot.slane %v367, 3
        %v556 = vsel %vm539, %v555, %v554
        %v557 = vrot.slane %v373, 2
        %v558 = vsel %vm542, %v557, %v556
        %v559 = vrot.slane %v379, 1
        %v560 = vsel %vm545, %v559, %v558
        %v561 = vrot.slane %v454, 7
        %v562 = vsel %vm527, %v561, %v448
        %v563 = vrot.slane %v460, 6
        %v564 = vsel %vm530, %v563, %v562
        %v565 = vrot.slane %v466, 5
        %v566 = vsel %vm533, %v565, %v564
        %v567 = vrot.slane %v472, 4
        %v568 = vsel %vm536, %v567, %v566
        %v569 = vrot.slane %v478, 3
        %v570 = vsel %vm539, %v569, %v568
        %v571 = vrot.slane %v484, 2
        %v572 = vsel %vm542, %v571, %v570
        %v573 = vrot.slane %v490, 1
        %v574 = vsel %vm545, %v573, %v572
        %v575 = vrot.slane %v456, 7
        %v576 = vsel %vm527, %v575, %v450
        %v577 = vrot.slane %v462, 6
        %v578 = vsel %vm530, %v577, %v576
        %v579 = vrot.slane %v468, 5
        %v580 = vsel %vm533, %v579, %v578
        %v581 = vrot.slane %v474, 4
        %v582 = vsel %vm536, %v581, %v580
        %v583 = vrot.slane %v480, 3
        %v584 = vsel %vm539, %v583, %v582
        %v585 = vrot.slane %v486, 2
        %v586 = vsel %vm542, %v585, %v584
        %v587 = vrot.slane %v492, 1
        %v588 = vsel %vm545, %v587, %v586
        %593 = vst [vmem:[%s203] sm:$0xff] %v546
        %594 = vst [vmem:[%s203 + $0x8] sm:$0xff] %v560
        %595 = vst [vmem:[%s203 + $0x10] sm:$0xff] %v574
        %596 = vst [vmem:[%s203 + $0x18] sm:$0xff] %v588
        %v597 = vrot.slane %v335, 1
        %v598 = vsel %vm527, %v341, %v597
        %v599 = vrot.slane %v347, 7
        %v600 = vsel %vm530, %v599, %v598
        %v601 = vrot.slane %v353, 6
        %v602 = vsel %vm533, %v601, %v600
        %v603 = vrot.slane %v359, 5
        %v604 = vsel %vm536, %v603, %v602
        %v605 = vrot.slane %v365, 4
        %v606 = vsel %vm539, %v605, %v604
        %v607 = vrot.slane %v371, 3
        %v608 = vsel %vm542, %v607, %v606
        %v609 = vrot.slane %v377, 2
        %v610 = vsel %vm545, %v609, %v608
        %v611 = vrot.slane %v337, 1
        %v612 = vsel %vm527, %v343, %v611
        %v613 = vrot.slane %v349, 7
        %v614 = vsel %vm530, %v613, %v612
        %v615 = vrot.slane %v355, 6
        %v616 = vsel %vm533, %v615, %v614
        %v617 = vrot.slane %v361, 5
        %v618 = vsel %vm536, %v617, %v616
        %v619 = vrot.slane %v367, 4
        %v620 = vsel %vm539, %v619, %v618
        %v621 = vrot.slane %v373, 3
        %v622 = vsel %vm542, %v621, %v620
        %v623 = vrot.slane %v379, 2
        %v624 = vsel %vm545, %v623, %v622
        %v625 = vrot.slane %v448, 1
        %v626 = vsel %vm527, %v454, %v625
        %v627 = vrot.slane %v460, 7
        %v628 = vsel %vm530, %v627, %v626
        %v629 = vrot.slane %v466, 6
        %v630 = vsel %vm533, %v629, %v628
        %v631 = vrot.slane %v472, 5
        %v632 = vsel %vm536, %v631, %v630
        %v633 = vrot.slane %v478, 4
        %v634 = vsel %vm539, %v633, %v632
        %v635 = vrot.slane %v484, 3
        %v636 = vsel %vm542, %v635, %v634
        %v637 = vrot.slane %v490, 2
        %v638 = vsel %vm545, %v637, %v636
        %v639 = vrot.slane %v450, 1
        %v640 = vsel %vm527, %v456, %v639
        %v641 = vrot.slane %v462, 7
        %v642 = vsel %vm530, %v641, %v640
        %v643 = vrot.slane %v468, 6
        %v644 = vsel %vm533, %v643, %v642
        %v645 = vrot.slane %v474, 5
        %v646 = vsel %vm536, %v645, %v644
        %v647 = vrot.slane %v480, 4
        %v648 = vsel %vm539, %v647, %v646
        %v649 = vrot.slane %v486, 3
        %v650 = vsel %vm542, %v649, %v648
        %v651 = vrot.slane %v492, 2
        %v652 = vsel %vm545, %v651, %v650
        %s657 = scalar_lea.vmem %s203, 32 [#allocation7]
        %658 = vst [vmem:[%s657] sm:$0xff] %v610
        %659 = vst [vmem:[%s657 + $0x8] sm:$0xff] %v624
        %660 = vst [vmem:[%s657 + $0x10] sm:$0xff] %v638
        %661 = vst [vmem:[%s657 + $0x18] sm:$0xff] %v652
        %v662 = vrot.slane %v335, 2
        %v663 = vrot.slane %v341, 1
        %v664 = vsel %vm527, %v663, %v662
        %v665 = vsel %vm530, %v347, %v664
        %v666 = vrot.slane %v353, 7
        %v667 = vsel %vm533, %v666, %v665
        %v668 = vrot.slane %v359, 6
        %v669 = vsel %vm536, %v668, %v667
        %v670 = vrot.slane %v365, 5
        %v671 = vsel %vm539, %v670, %v669
        %v672 = vrot.slane %v371, 4
        %v673 = vsel %vm542, %v672, %v671
        %v674 = vrot.slane %v377, 3
        %v675 = vsel %vm545, %v674, %v673
        %v676 = vrot.slane %v337, 2
        %v677 = vrot.slane %v343, 1
        %v678 = vsel %vm527, %v677, %v676
        %v679 = vsel %vm530, %v349, %v678
        %v680 = vrot.slane %v355, 7
        %v681 = vsel %vm533, %v680, %v679
        %v682 = vrot.slane %v361, 6
        %v683 = vsel %vm536, %v682, %v681
        %v684 = vrot.slane %v367, 5
        %v685 = vsel %vm539, %v684, %v683
        %v686 = vrot.slane %v373, 4
        %v687 = vsel %vm542, %v686, %v685
        %v688 = vrot.slane %v379, 3
        %v689 = vsel %vm545, %v688, %v687
        %v690 = vrot.slane %v448, 2
        %v691 = vrot.slane %v454, 1
        %v692 = vsel %vm527, %v691, %v690
        %v693 = vsel %vm530, %v460, %v692
        %v694 = vrot.slane %v466, 7
        %v695 = vsel %vm533, %v694, %v693
        %v696 = vrot.slane %v472, 6
        %v697 = vsel %vm536, %v696, %v695
        %v698 = vrot.slane %v478, 5
        %v699 = vsel %vm539, %v698, %v697
        %v700 = vrot.slane %v484, 4
        %v701 = vsel %vm542, %v700, %v699
        %v702 = vrot.slane %v490, 3
        %v703 = vsel %vm545, %v702, %v701
        %v704 = vrot.slane %v450, 2
        %v705 = vrot.slane %v456, 1
        %v706 = vsel %vm527, %v705, %v704
        %v707 = vsel %vm530, %v462, %v706
        %v708 = vrot.slane %v468, 7
        %v709 = vsel %vm533, %v708, %v707
        %v710 = vrot.slane %v474, 6
        %v711 = vsel %vm536, %v710, %v709
        %v712 = vrot.slane %v480, 5
        %v713 = vsel %vm539, %v712, %v711
        %v714 = vrot.slane %v486, 4
        %v715 = vsel %vm542, %v714, %v713
        %v716 = vrot.slane %v492, 3
        %v717 = vsel %vm545, %v716, %v715
        %s722 = scalar_lea.vmem %s203, 64 [#allocation7]
        %723 = vst [vmem:[%s722] sm:$0xff] %v675
        %724 = vst [vmem:[%s722 + $0x8] sm:$0xff] %v689
        %725 = vst [vmem:[%s722 + $0x10] sm:$0xff] %v703
        %726 = vst [vmem:[%s722 + $0x18] sm:$0xff] %v717
        %v727 = vrot.slane %v335, 3
        %v728 = vrot.slane %v341, 2
        %v729 = vsel %vm527, %v728, %v727
        %v730 = vrot.slane %v347, 1
        %v731 = vsel %vm530, %v730, %v729
        %v732 = vsel %vm533, %v353, %v731
        %v733 = vrot.slane %v359, 7
        %v734 = vsel %vm536, %v733, %v732
        %v735 = vrot.slane %v365, 6
        %v736 = vsel %vm539, %v735, %v734
        %v737 = vrot.slane %v371, 5
        %v738 = vsel %vm542, %v737, %v736
        %v739 = vrot.slane %v377, 4
        %v740 = vsel %vm545, %v739, %v738
        %v741 = vrot.slane %v337, 3
        %v742 = vrot.slane %v343, 2
        %v743 = vsel %vm527, %v742, %v741
        %v744 = vrot.slane %v349, 1
        %v745 = vsel %vm530, %v744, %v743
        %v746 = vsel %vm533, %v355, %v745
        %v747 = vrot.slane %v361, 7
        %v748 = vsel %vm536, %v747, %v746
        %v749 = vrot.slane %v367, 6
        %v750 = vsel %vm539, %v749, %v748
        %v751 = vrot.slane %v373, 5
        %v752 = vsel %vm542, %v751, %v750
        %v753 = vrot.slane %v379, 4
        %v754 = vsel %vm545, %v753, %v752
        %v755 = vrot.slane %v448, 3
        %v756 = vrot.slane %v454, 2
        %v757 = vsel %vm527, %v756, %v755
        %v758 = vrot.slane %v460, 1
        %v759 = vsel %vm530, %v758, %v757
        %v760 = vsel %vm533, %v466, %v759
        %v761 = vrot.slane %v472, 7
        %v762 = vsel %vm536, %v761, %v760
        %v763 = vrot.slane %v478, 6
        %v764 = vsel %vm539, %v763, %v762
        %v765 = vrot.slane %v484, 5
        %v766 = vsel %vm542, %v765, %v764
        %v767 = vrot.slane %v490, 4
        %v768 = vsel %vm545, %v767, %v766
        %v769 = vrot.slane %v450, 3
        %v770 = vrot.slane %v456, 2
        %v771 = vsel %vm527, %v770, %v769
        %v772 = vrot.slane %v462, 1
        %v773 = vsel %vm530, %v772, %v771
        %v774 = vsel %vm533, %v468, %v773
        %v775 = vrot.slane %v474, 7
        %v776 = vsel %vm536, %v775, %v774
        %v777 = vrot.slane %v480, 6
        %v778 = vsel %vm539, %v777, %v776
        %v779 = vrot.slane %v486, 5
        %v780 = vsel %vm542, %v779, %v778
        %v781 = vrot.slane %v492, 4
        %v782 = vsel %vm545, %v781, %v780
        %s787 = scalar_lea.vmem %s203, 96 [#allocation7]
        %788 = vst [vmem:[%s787] sm:$0xff] %v740
        %789 = vst [vmem:[%s787 + $0x8] sm:$0xff] %v754
        %790 = vst [vmem:[%s787 + $0x10] sm:$0xff] %v768
        %791 = vst [vmem:[%s787 + $0x18] sm:$0xff] %v782
        %v792 = vrot.slane %v335, 4
        %v793 = vrot.slane %v341, 3
        %v794 = vsel %vm527, %v793, %v792
        %v795 = vrot.slane %v347, 2
        %v796 = vsel %vm530, %v795, %v794
        %v797 = vrot.slane %v353, 1
        %v798 = vsel %vm533, %v797, %v796
        %v799 = vsel %vm536, %v359, %v798
        %v800 = vrot.slane %v365, 7
        %v801 = vsel %vm539, %v800, %v799
        %v802 = vrot.slane %v371, 6
        %v803 = vsel %vm542, %v802, %v801
        %v804 = vrot.slane %v377, 5
        %v805 = vsel %vm545, %v804, %v803
        %v806 = vrot.slane %v337, 4
        %v807 = vrot.slane %v343, 3
        %v808 = vsel %vm527, %v807, %v806
        %v809 = vrot.slane %v349, 2
        %v810 = vsel %vm530, %v809, %v808
        %v811 = vrot.slane %v355, 1
        %v812 = vsel %vm533, %v811, %v810
        %v813 = vsel %vm536, %v361, %v812
        %v814 = vrot.slane %v367, 7
        %v815 = vsel %vm539, %v814, %v813
        %v816 = vrot.slane %v373, 6
        %v817 = vsel %vm542, %v816, %v815
        %v818 = vrot.slane %v379, 5
        %v819 = vsel %vm545, %v818, %v817
        %v820 = vrot.slane %v448, 4
        %v821 = vrot.slane %v454, 3
        %v822 = vsel %vm527, %v821, %v820
        %v823 = vrot.slane %v460, 2
        %v824 = vsel %vm530, %v823, %v822
        %v825 = vrot.slane %v466, 1
        %v826 = vsel %vm533, %v825, %v824
        %v827 = vsel %vm536, %v472, %v826
        %v828 = vrot.slane %v478, 7
        %v829 = vsel %vm539, %v828, %v827
        %v830 = vrot.slane %v484, 6
        %v831 = vsel %vm542, %v830, %v829
        %v832 = vrot.slane %v490, 5
        %v833 = vsel %vm545, %v832, %v831
        %v834 = vrot.slane %v450, 4
        %v835 = vrot.slane %v456, 3
        %v836 = vsel %vm527, %v835, %v834
        %v837 = vrot.slane %v462, 2
        %v838 = vsel %vm530, %v837, %v836
        %v839 = vrot.slane %v468, 1
        %v840 = vsel %vm533, %v839, %v838
        %v841 = vsel %vm536, %v474, %v840
        %v842 = vrot.slane %v480, 7
        %v843 = vsel %vm539, %v842, %v841
        %v844 = vrot.slane %v486, 6
        %v845 = vsel %vm542, %v844, %v843
        %v846 = vrot.slane %v492, 5
        %v847 = vsel %vm545, %v846, %v845
        %s852 = scalar_lea.vmem %s203, 128 [#allocation7]
        %853 = vst [vmem:[%s852] sm:$0xff] %v805
        %854 = vst [vmem:[%s852 + $0x8] sm:$0xff] %v819
        %855 = vst [vmem:[%s852 + $0x10] sm:$0xff] %v833
        %856 = vst [vmem:[%s852 + $0x18] sm:$0xff] %v847
        %v857 = vrot.slane %v335, 5
        %v858 = vrot.slane %v341, 4
        %v859 = vsel %vm527, %v858, %v857
        %v860 = vrot.slane %v347, 3
        %v861 = vsel %vm530, %v860, %v859
        %v862 = vrot.slane %v353, 2
        %v863 = vsel %vm533, %v862, %v861
        %v864 = vrot.slane %v359, 1
        %v865 = vsel %vm536, %v864, %v863
        %v866 = vsel %vm539, %v365, %v865
        %v867 = vrot.slane %v371, 7
        %v868 = vsel %vm542, %v867, %v866
        %v869 = vrot.slane %v377, 6
        %v870 = vsel %vm545, %v869, %v868
        %v871 = vrot.slane %v337, 5
        %v872 = vrot.slane %v343, 4
        %v873 = vsel %vm527, %v872, %v871
        %v874 = vrot.slane %v349, 3
        %v875 = vsel %vm530, %v874, %v873
        %v876 = vrot.slane %v355, 2
        %v877 = vsel %vm533, %v876, %v875
        %v878 = vrot.slane %v361, 1
        %v879 = vsel %vm536, %v878, %v877
        %v880 = vsel %vm539, %v367, %v879
        %v881 = vrot.slane %v373, 7
        %v882 = vsel %vm542, %v881, %v880
        %v883 = vrot.slane %v379, 6
        %v884 = vsel %vm545, %v883, %v882
        %v885 = vrot.slane %v448, 5
        %v886 = vrot.slane %v454, 4
        %v887 = vsel %vm527, %v886, %v885
        %v888 = vrot.slane %v460, 3
        %v889 = vsel %vm530, %v888, %v887
        %v890 = vrot.slane %v466, 2
        %v891 = vsel %vm533, %v890, %v889
        %v892 = vrot.slane %v472, 1
        %v893 = vsel %vm536, %v892, %v891
        %v894 = vsel %vm539, %v478, %v893
        %v895 = vrot.slane %v484, 7
        %v896 = vsel %vm542, %v895, %v894
        %v897 = vrot.slane %v490, 6
        %v898 = vsel %vm545, %v897, %v896
        %v899 = vrot.slane %v450, 5
        %v900 = vrot.slane %v456, 4
        %v901 = vsel %vm527, %v900, %v899
        %v902 = vrot.slane %v462, 3
        %v903 = vsel %vm530, %v902, %v901
        %v904 = vrot.slane %v468, 2
        %v905 = vsel %vm533, %v904, %v903
        %v906 = vrot.slane %v474, 1
        %v907 = vsel %vm536, %v906, %v905
        %v908 = vsel %vm539, %v480, %v907
        %v909 = vrot.slane %v486, 7
        %v910 = vsel %vm542, %v909, %v908
        %v911 = vrot.slane %v492, 6
        %v912 = vsel %vm545, %v911, %v910
        %s917 = scalar_lea.vmem %s203, 160 [#allocation7]
        %918 = vst [vmem:[%s917] sm:$0xff] %v870
        %919 = vst [vmem:[%s917 + $0x8] sm:$0xff] %v884
        %920 = vst [vmem:[%s917 + $0x10] sm:$0xff] %v898
        %921 = vst [vmem:[%s917 + $0x18] sm:$0xff] %v912
        %v922 = vrot.slane %v335, 6
        %v923 = vrot.slane %v341, 5
        %v924 = vsel %vm527, %v923, %v922
        %v925 = vrot.slane %v347, 4
        %v926 = vsel %vm530, %v925, %v924
        %v927 = vrot.slane %v353, 3
        %v928 = vsel %vm533, %v927, %v926
        %v929 = vrot.slane %v359, 2
        %v930 = vsel %vm536, %v929, %v928
        %v931 = vrot.slane %v365, 1
        %v932 = vsel %vm539, %v931, %v930
        %v933 = vsel %vm542, %v371, %v932
        %v934 = vrot.slane %v377, 7
        %v935 = vsel %vm545, %v934, %v933
        %v936 = vrot.slane %v337, 6
        %v937 = vrot.slane %v343, 5
        %v938 = vsel %vm527, %v937, %v936
        %v939 = vrot.slane %v349, 4
        %v940 = vsel %vm530, %v939, %v938
        %v941 = vrot.slane %v355, 3
        %v942 = vsel %vm533, %v941, %v940
        %v943 = vrot.slane %v361, 2
        %v944 = vsel %vm536, %v943, %v942
        %v945 = vrot.slane %v367, 1
        %v946 = vsel %vm539, %v945, %v944
        %v947 = vsel %vm542, %v373, %v946
        %v948 = vrot.slane %v379, 7
        %v949 = vsel %vm545, %v948, %v947
        %v950 = vrot.slane %v448, 6
        %v951 = vrot.slane %v454, 5
        %v952 = vsel %vm527, %v951, %v950
        %v953 = vrot.slane %v460, 4
        %v954 = vsel %vm530, %v953, %v952
        %v955 = vrot.slane %v466, 3
        %v956 = vsel %vm533, %v955, %v954
        %v957 = vrot.slane %v472, 2
        %v958 = vsel %vm536, %v957, %v956
        %v959 = vrot.slane %v478, 1
        %v960 = vsel %vm539, %v959, %v958
        %v961 = vsel %vm542, %v484, %v960
        %v962 = vrot.slane %v490, 7
        %v963 = vsel %vm545, %v962, %v961
        %v964 = vrot.slane %v450, 6
        %v965 = vrot.slane %v456, 5
        %v966 = vsel %vm527, %v965, %v964
        %v967 = vrot.slane %v462, 4
        %v968 = vsel %vm530, %v967, %v966
        %v969 = vrot.slane %v468, 3
        %v970 = vsel %vm533, %v969, %v968
        %v971 = vrot.slane %v474, 2
        %v972 = vsel %vm536, %v971, %v970
        %v973 = vrot.slane %v480, 1
        %v974 = vsel %vm539, %v973, %v972
        %v975 = vsel %vm542, %v486, %v974
        %v976 = vrot.slane %v492, 7
        %v977 = vsel %vm545, %v976, %v975
        %s982 = scalar_lea.vmem %s203, 192 [#allocation7]
        %983 = vst [vmem:[%s982] sm:$0xff] %v935
        %984 = vst [vmem:[%s982 + $0x8] sm:$0xff] %v949
        %985 = vst [vmem:[%s982 + $0x10] sm:$0xff] %v963
        %986 = vst [vmem:[%s982 + $0x18] sm:$0xff] %v977
        %v987 = vrot.slane %v335, 7
        %v988 = vrot.slane %v341, 6
        %v989 = vsel %vm527, %v988, %v987
        %v990 = vrot.slane %v347, 5
        %v991 = vsel %vm530, %v990, %v989
        %v992 = vrot.slane %v353, 4
        %v993 = vsel %vm533, %v992, %v991
        %v994 = vrot.slane %v359, 3
        %v995 = vsel %vm536, %v994, %v993
        %v996 = vrot.slane %v365, 2
        %v997 = vsel %vm539, %v996, %v995
        %v998 = vrot.slane %v371, 1
        %v999 = vsel %vm542, %v998, %v997
        %v1000 = vsel %vm545, %v377, %v999
        %v1001 = vrot.slane %v337, 7
        %v1002 = vrot.slane %v343, 6
        %v1003 = vsel %vm527, %v1002, %v1001
        %v1004 = vrot.slane %v349, 5
        %v1005 = vsel %vm530, %v1004, %v1003
        %v1006 = vrot.slane %v355, 4
        %v1007 = vsel %vm533, %v1006, %v1005
        %v1008 = vrot.slane %v361, 3
        %v1009 = vsel %vm536, %v1008, %v1007
        %v1010 = vrot.slane %v367, 2
        %v1011 = vsel %vm539, %v1010, %v1009
        %v1012 = vrot.slane %v373, 1
        %v1013 = vsel %vm542, %v1012, %v1011
        %v1014 = vsel %vm545, %v379, %v1013
        %v1015 = vrot.slane %v448, 7
        %v1016 = vrot.slane %v454, 6
        %v1017 = vsel %vm527, %v1016, %v1015
        %v1018 = vrot.slane %v460, 5
        %v1019 = vsel %vm530, %v1018, %v1017
        %v1020 = vrot.slane %v466, 4
        %v1021 = vsel %vm533, %v1020, %v1019
        %v1022 = vrot.slane %v472, 3
        %v1023 = vsel %vm536, %v1022, %v1021
        %v1024 = vrot.slane %v478, 2
        %v1025 = vsel %vm539, %v1024, %v1023
        %v1026 = vrot.slane %v484, 1
        %v1027 = vsel %vm542, %v1026, %v1025
        %v1028 = vsel %vm545, %v490, %v1027
        %v1029 = vrot.slane %v450, 7
        %v1030 = vrot.slane %v456, 6
        %v1031 = vsel %vm527, %v1030, %v1029
        %v1032 = vrot.slane %v462, 5
        %v1033 = vsel %vm530, %v1032, %v1031
        %v1034 = vrot.slane %v468, 4
        %v1035 = vsel %vm533, %v1034, %v1033
        %v1036 = vrot.slane %v474, 3
        %v1037 = vsel %vm536, %v1036, %v1035
        %v1038 = vrot.slane %v480, 2
        %v1039 = vsel %vm539, %v1038, %v1037
        %v1040 = vrot.slane %v486, 1
        %v1041 = vsel %vm542, %v1040, %v1039
        %v1042 = vsel %vm545, %v492, %v1041
        %s1047 = scalar_lea.vmem %s203, 224 [#allocation7]
        %1048 = vst [vmem:[%s1047] sm:$0xff] %v1000
        %1049 = vst [vmem:[%s1047 + $0x8] sm:$0xff] %v1014
        %1050 = vst [vmem:[%s1047 + $0x10] sm:$0xff] %v1028
        %1051 = vst [vmem:[%s1047 + $0x18] sm:$0xff] %v1042
        %s1052 = sand.u32 %s97, 1
        %s1053 = scalar_lea.sflag [#allocation4], %s1052
        %s1054 = sand.u32 %s97, 1
        %s1055 = smul.addr %s1054, 256
        %s1056 = scalar_lea.vmem [#allocation7], %s1055
        // Predicated region
        $region41: #{tpu_custom_call.1} parent=31 // pred_check
          %p1057 = pneg %p107
        $region42: #{tpu_custom_call.1} parent=31 // pred_check_branch
          %1059 = sbr.rel (%p1057) target = $region44
        $region43: #{tpu_custom_call.1} parent=31 // pred_region
          %s1061 = ssub.s32 4096, 4096
          %1062 = vsyncadd %s1053, %s1061
          %s1063 = smul.addr %s21, 4
          %s1064 = smul.addr %s1063, 128
          %s1065 = scalar_lea.hbm %s3, %s1064
          %s1066 = sshll.u32 %s1056, 4
          %s1067 = int_to_ptr.vmem [resolvable:$true] %s1066
          %1072 = dma.vmem_to_hbm [thread:$0]  %s1067, 4096, %s1065, %s1053, 512, 1024, 32
        $region44: #{tpu_custom_call.1} parent=31 // pred_fallthru
          _
      $region32: #{tpu_custom_call.1} parent=5 // pred_fallthru
        _
      %p1073 = scmp.le.s32.totalorder 2, %s16
      // Predicated region
      $region45: #{tpu_custom_call.1} parent=5 // pred_check
        %p1074 = pneg %p1073
      $region46: #{tpu_custom_call.1} parent=5 // pred_check_branch
        %1076 = sbr.rel (%p1074) target = $region48
      $region47: #{tpu_custom_call.1} parent=5 // pred_region
        %s1077 = ssub.s32 %s16, 2
        // Predicated region
        $region49: #{tpu_custom_call.1} parent=47 // pred_check
          %p1078 = pneg %p113
        $region50: #{tpu_custom_call.1} parent=47 // pred_check_branch
          %1080 = sbr.rel (%p1078) target = $region52
        $region51: #{tpu_custom_call.1} parent=47 // pred_region
          %s1081 = sand.u32 %s98, 1
          %s1082 = scalar_lea.sflag [#allocation4], %s1081
          %s1083 = sand.u32 %s98, 1
          %s1084 = smul.addr %s1083, 256
          %s1085 = scalar_lea.vmem [#allocation7], %s1084
          %1086 = dma.done %s1082, 4096
        $region52: #{tpu_custom_call.1} parent=47 // pred_fallthru
          _
      $region48: #{tpu_custom_call.1} parent=5 // pred_fallthru
        _
    $region6: #{tpu_custom_call.1} parent=1 // loop_footer
      %s20 = sadd.s32 1, %s16
    $region7: #{tpu_custom_call.1} parent=1 // loop_footer_branch
      %15 = sbr.rel target = $region3
    $region8: #{tpu_custom_call.1} parent=1 // loop_exit
      _
    %1087 = vsyncpa [#allocation3], 1
    %s1088 = scalar_lea.sflag [#allocation3], 1
    %1089 = vsyncpa %s1088, 1
    %1090 = vsyncpa [#allocation6], 1
    %1091 = vsyncpa [#allocation4], 1
    %s1092 = scalar_lea.sflag [#allocation4], 1
    %1093 = vsyncpa %s1092, 1

</llo_original>
